<compile_context>
chip_gen: v6e
topology: v6e:2x2x1
jax: 0.10.0
libtpu: 0.0.40
codegen_flags: <defaults>
</compile_context>

<pallas_src>
import jax
import jax.numpy as jnp
from jax.experimental import pallas as pl
from jax.experimental.pallas import tpu as pltpu

LANE = 128            # pad every feature dim to a multiple of the lane width
MAX_BATCH_TILE = 256  # rows per grid step once the batch is large enough


def _round_up(x, m):
    return ((x + m - 1) // m) * m


def adnn_kernel(x_ref,
                w1_ref, b1_ref,
                w2_ref, b2_ref,
                w3_ref, b3_ref,
                w4_ref, b4_ref,
                w5_ref, b5_ref,
                o_ref):
    """One batch tile: 5 x (bf16 matmul with f32 accumulation, bias, ReLU)."""

    def layer(h_bf16, w_ref, b_ref, relu):
        acc = jnp.dot(h_bf16, w_ref[...],
                      preferred_element_type=jnp.float32)
        acc = acc + b_ref[...]              # bias kept in f32
        if relu:
            acc = jnp.maximum(acc, 0.0)
        return acc

    h = x_ref[...]                                           # bf16 [bm, K1]
    h = layer(h, w1_ref, b1_ref, True).astype(jnp.bfloat16)
    h = layer(h, w2_ref, b2_ref, True).astype(jnp.bfloat16)
    h = layer(h, w3_ref, b3_ref, True).astype(jnp.bfloat16)
    h = layer(h, w4_ref, b4_ref, True).astype(jnp.bfloat16)
    h = layer(h, w5_ref, b5_ref, False)                      # final: no ReLU
    o_ref[...] = h.astype(o_ref.dtype)


def adnn_forward(x, params):
    """params = [(W1, b1), ..., (W5, b5)]; Wi: [in, out] f32, bi: [1, out] f32.

    Computes (((x @ W1 + b1).relu() ... ) @ W5 + b5), matching the PyTorch
    ADNN forward (whose nn.Linear stores W as [out, in]; here W is already
    transposed to [in, out]).
    """
    batch, in_dim = x.shape
    out_dim = params[-1][0].shape[1]

    # --- batch tiling -----------------------------------------------------
    if batch >= MAX_BATCH_TILE:
        bm = MAX_BATCH_TILE
    else:
        bm = _round_up(batch, 8)          # single sublane-aligned tile
    padded_batch = _round_up(batch, bm)
    grid = (padded_batch // bm,)

    # --- lane-pad the input -------------------------------------------------
    in_pad = _round_up(in_dim, LANE)
    out_pad = _round_up(out_dim, LANE)
    x_p = jnp.zeros((padded_batch, in_pad), jnp.bfloat16)
    x_p = x_p.at[:batch, :in_dim].set(x.astype(jnp.bfloat16))

    flat_args = [x_p]
    in_specs = [pl.BlockSpec((bm, in_pad), lambda i: (i, 0))]

    flops = 0
    bytes_accessed = x_p.size * 2  # bf16 input

    # --- lane-pad weights / biases; resident BlockSpecs ----------------------
    for w, b in params:
        k, n = w.shape
        kp, np_ = _round_up(k, LANE), _round_up(n, LANE)
        w_p = jnp.zeros((kp, np_), jnp.bfloat16).at[:k, :n].set(
            w.astype(jnp.bfloat16))
        b_p = jnp.zeros((1, np_), jnp.float32).at[:, :n].set(
            b.astype(jnp.float32))
        flat_args += [w_p, b_p]
        # Resident operands: index_map ignores the grid index -> loaded once,
        # held in VMEM across all batch tiles.  No closed-over loop variables.
        in_specs.append(pl.BlockSpec((kp, np_), lambda i: (0, 0)))
        in_specs.append(pl.BlockSpec((1, np_), lambda i: (0, 0)))
        flops += 2 * padded_batch * kp * np_
        bytes_accessed += w_p.size * 2 + b_p.size * 4

    bytes_accessed += padded_batch * out_pad * 4  # f32 output

    out_spec = pl.BlockSpec((bm, out_pad), lambda i: (i, 0))

    out_padded = pl.pallas_call(
        adnn_kernel,
        out_shape=jax.ShapeDtypeStruct((padded_batch, out_pad), jnp.float32),
        grid=grid,
        in_specs=in_specs,
        out_specs=out_spec,
        compiler_params=pltpu.CompilerParams(
            dimension_semantics=("parallel",)),
        cost_estimate=pl.CostEstimate(
            flops=flops, transcendentals=0, bytes_accessed=bytes_accessed),
    )(*flat_args)

    return out_padded[:batch, :out_dim]


def init_params(key, input_dim, hidden_dims, output_dim):
    """Deterministic init matching nn.Linear shapes (stored as [in, out]).

    Note: fc4 is Linear(hidden_dims[2], hidden_dims[2]) exactly as in the
    PyTorch spec (dims list intentionally repeats hidden_dims[2]).
    """
    dims = [input_dim, hidden_dims[0], hidden_dims[1], hidden_dims[2],
            hidden_dims[2], output_dim]
    params = []
    for i in range(5):
        key, kw, kb = jax.random.split(key, 3)
        fan_in = dims[i]
        bound = 1.0 / jnp.sqrt(fan_in)
        w = jax.random.uniform(kw, (dims[i], dims[i + 1]),
                               minval=-bound, maxval=bound,
                               dtype=jnp.float32)
        b = jax.random.uniform(kb, (1, dims[i + 1]),
                               minval=-bound, maxval=bound,
                               dtype=jnp.float32)
        params.append((w, b))
    return params


def adnn_reference(x, params):
    """Mixed-precision reference mirroring the kernel (bf16 matmul, f32 acc)."""
    h = x.astype(jnp.bfloat16)
    for i, (w, b) in enumerate(params):
        acc = jnp.dot(h, w.astype(jnp.bfloat16),
                      preferred_element_type=jnp.float32) + b
        if i < len(params) - 1:
            h = jnp.maximum(acc, 0.0).astype(jnp.bfloat16)
        else:
            h = acc
    return h


if __name__ == "__main__":
    key = jax.random.PRNGKey(0)
    key, kx = jax.random.split(key)

    batch = 8
    input_dim = 32
    hidden_dims = (64, 64, 32)
    output_dim = 16

    x = jax.random.normal(kx, (batch, input_dim), dtype=jnp.float32)
    params = init_params(key, input_dim, hidden_dims, output_dim)

    out = adnn_forward(x, params)
    out = jax.block_until_ready(out)

    ref = adnn_reference(x, params)
    assert out.shape == (batch, output_dim)
    assert jnp.allclose(out, ref, atol=1e-3, rtol=1e-2), (
        float(jnp.max(jnp.abs(out - ref))))

    print("KERNEL_OK")
</pallas_src>

<mosaic_0001>
module attributes {stable_mosaic.version = 11 : i64} {
  func.func @adnn_kernel(%arg0: i32, %arg1: memref<8x128xbf16, #tpu.memory_space<vmem>>, %arg2: memref<128x128xbf16, #tpu.memory_space<vmem>>, %arg3: memref<1x128xf32, #tpu.memory_space<vmem>>, %arg4: memref<128x128xbf16, #tpu.memory_space<vmem>>, %arg5: memref<1x128xf32, #tpu.memory_space<vmem>>, %arg6: memref<128x128xbf16, #tpu.memory_space<vmem>>, %arg7: memref<1x128xf32, #tpu.memory_space<vmem>>, %arg8: memref<128x128xbf16, #tpu.memory_space<vmem>>, %arg9: memref<1x128xf32, #tpu.memory_space<vmem>>, %arg10: memref<128x128xbf16, #tpu.memory_space<vmem>>, %arg11: memref<1x128xf32, #tpu.memory_space<vmem>>, %arg12: memref<8x128xf32, #tpu.memory_space<vmem>>) attributes {dimension_semantics = [#tpu.dimension_semantics<parallel>], iteration_bounds = array<i64: 1>, scalar_prefetch = 0 : i64, scratch_operands = 0 : i64, tpu.core_type = #tpu.core_type<tc>, window_params = [{transform_indices = @transform_0, window_bounds = array<i64: 8, 128>}, {pipeline_mode = #tpu.pipeline_mode<synchronous>, transform_indices = @transform_1, window_bounds = array<i64: 128, 128>}, {pipeline_mode = #tpu.pipeline_mode<synchronous>, transform_indices = @transform_2, window_bounds = array<i64: 1, 128>}, {pipeline_mode = #tpu.pipeline_mode<synchronous>, transform_indices = @transform_3, window_bounds = array<i64: 128, 128>}, {pipeline_mode = #tpu.pipeline_mode<synchronous>, transform_indices = @transform_4, window_bounds = array<i64: 1, 128>}, {pipeline_mode = #tpu.pipeline_mode<synchronous>, transform_indices = @transform_5, window_bounds = array<i64: 128, 128>}, {pipeline_mode = #tpu.pipeline_mode<synchronous>, transform_indices = @transform_6, window_bounds = array<i64: 1, 128>}, {pipeline_mode = #tpu.pipeline_mode<synchronous>, transform_indices = @transform_7, window_bounds = array<i64: 128, 128>}, {pipeline_mode = #tpu.pipeline_mode<synchronous>, transform_indices = @transform_8, window_bounds = array<i64: 1, 128>}, {pipeline_mode = #tpu.pipeline_mode<synchronous>, transform_indices = @transform_9, window_bounds = array<i64: 128, 128>}, {pipeline_mode = #tpu.pipeline_mode<synchronous>, transform_indices = @transform_10, window_bounds = array<i64: 1, 128>}, {transform_indices = @transform_11, window_bounds = array<i64: 8, 128>}]} {
    %c0 = arith.constant 0 : index
    %c0_0 = arith.constant 0 : index
    %0 = vector.load %arg1[%c0, %c0_0] : memref<8x128xbf16, #tpu.memory_space<vmem>>, vector<8x128xbf16>
    %c0_1 = arith.constant 0 : index
    %c0_2 = arith.constant 0 : index
    %1 = vector.load %arg2[%c0_1, %c0_2] : memref<128x128xbf16, #tpu.memory_space<vmem>>, vector<128x128xbf16>
    %cst = arith.constant dense<0.000000e+00> : vector<8x128xf32>
    %2 = tpu.matmul %0, %1, %cst {dimension_numbers = #tpu.dot_dimension_numbers<[1], [0], [0], [1], [0, 0, 1, 1], [], []>} : vector<8x128xbf16>, vector<128x128xbf16>, vector<8x128xf32> -> vector<8x128xf32>
    %c0_3 = arith.constant 0 : index
    %c0_4 = arith.constant 0 : index
    %3 = vector.load %arg3[%c0_3, %c0_4] : memref<1x128xf32, #tpu.memory_space<vmem>>, vector<1x128xf32>
    %4 = vector.broadcast %3 : vector<1x128xf32> to vector<8x128xf32>
    %5 = arith.addf %2, %4 : vector<8x128xf32>
    %cst_5 = arith.constant 0.000000e+00 : f32
    %6 = vector.broadcast %cst_5 : f32 to vector<8x128xf32>
    %7 = arith.maximumf %5, %6 : vector<8x128xf32>
    %8 = arith.truncf %7 : vector<8x128xf32> to vector<8x128xbf16>
    %c0_6 = arith.constant 0 : index
    %c0_7 = arith.constant 0 : index
    %9 = vector.load %arg4[%c0_6, %c0_7] : memref<128x128xbf16, #tpu.memory_space<vmem>>, vector<128x128xbf16>
    %cst_8 = arith.constant dense<0.000000e+00> : vector<8x128xf32>
    %10 = tpu.matmul %8, %9, %cst_8 {dimension_numbers = #tpu.dot_dimension_numbers<[1], [0], [0], [1], [0, 0, 1, 1], [], []>} : vector<8x128xbf16>, vector<128x128xbf16>, vector<8x128xf32> -> vector<8x128xf32>
    %c0_9 = arith.constant 0 : index
    %c0_10 = arith.constant 0 : index
    %11 = vector.load %arg5[%c0_9, %c0_10] : memref<1x128xf32, #tpu.memory_space<vmem>>, vector<1x128xf32>
    %12 = vector.broadcast %11 : vector<1x128xf32> to vector<8x128xf32>
    %13 = arith.addf %10, %12 : vector<8x128xf32>
    %cst_11 = arith.constant 0.000000e+00 : f32
    %14 = vector.broadcast %cst_11 : f32 to vector<8x128xf32>
    %15 = arith.maximumf %13, %14 : vector<8x128xf32>
    %16 = arith.truncf %15 : vector<8x128xf32> to vector<8x128xbf16>
    %c0_12 = arith.constant 0 : index
    %c0_13 = arith.constant 0 : index
    %17 = vector.load %arg6[%c0_12, %c0_13] : memref<128x128xbf16, #tpu.memory_space<vmem>>, vector<128x128xbf16>
    %cst_14 = arith.constant dense<0.000000e+00> : vector<8x128xf32>
    %18 = tpu.matmul %16, %17, %cst_14 {dimension_numbers = #tpu.dot_dimension_numbers<[1], [0], [0], [1], [0, 0, 1, 1], [], []>} : vector<8x128xbf16>, vector<128x128xbf16>, vector<8x128xf32> -> vector<8x128xf32>
    %c0_15 = arith.constant 0 : index
    %c0_16 = arith.constant 0 : index
    %19 = vector.load %arg7[%c0_15, %c0_16] : memref<1x128xf32, #tpu.memory_space<vmem>>, vector<1x128xf32>
    %20 = vector.broadcast %19 : vector<1x128xf32> to vector<8x128xf32>
    %21 = arith.addf %18, %20 : vector<8x128xf32>
    %cst_17 = arith.constant 0.000000e+00 : f32
    %22 = vector.broadcast %cst_17 : f32 to vector<8x128xf32>
    %23 = arith.maximumf %21, %22 : vector<8x128xf32>
    %24 = arith.truncf %23 : vector<8x128xf32> to vector<8x128xbf16>
    %c0_18 = arith.constant 0 : index
    %c0_19 = arith.constant 0 : index
    %25 = vector.load %arg8[%c0_18, %c0_19] : memref<128x128xbf16, #tpu.memory_space<vmem>>, vector<128x128xbf16>
    %cst_20 = arith.constant dense<0.000000e+00> : vector<8x128xf32>
    %26 = tpu.matmul %24, %25, %cst_20 {dimension_numbers = #tpu.dot_dimension_numbers<[1], [0], [0], [1], [0, 0, 1, 1], [], []>} : vector<8x128xbf16>, vector<128x128xbf16>, vector<8x128xf32> -> vector<8x128xf32>
    %c0_21 = arith.constant 0 : index
    %c0_22 = arith.constant 0 : index
    %27 = vector.load %arg9[%c0_21, %c0_22] : memref<1x128xf32, #tpu.memory_space<vmem>>, vector<1x128xf32>
    %28 = vector.broadcast %27 : vector<1x128xf32> to vector<8x128xf32>
    %29 = arith.addf %26, %28 : vector<8x128xf32>
    %cst_23 = arith.constant 0.000000e+00 : f32
    %30 = vector.broadcast %cst_23 : f32 to vector<8x128xf32>
    %31 = arith.maximumf %29, %30 : vector<8x128xf32>
    %32 = arith.truncf %31 : vector<8x128xf32> to vector<8x128xbf16>
    %c0_24 = arith.constant 0 : index
    %c0_25 = arith.constant 0 : index
    %33 = vector.load %arg10[%c0_24, %c0_25] : memref<128x128xbf16, #tpu.memory_space<vmem>>, vector<128x128xbf16>
    %cst_26 = arith.constant dense<0.000000e+00> : vector<8x128xf32>
    %34 = tpu.matmul %32, %33, %cst_26 {dimension_numbers = #tpu.dot_dimension_numbers<[1], [0], [0], [1], [0, 0, 1, 1], [], []>} : vector<8x128xbf16>, vector<128x128xbf16>, vector<8x128xf32> -> vector<8x128xf32>
    %c0_27 = arith.constant 0 : index
    %c0_28 = arith.constant 0 : index
    %35 = vector.load %arg11[%c0_27, %c0_28] : memref<1x128xf32, #tpu.memory_space<vmem>>, vector<1x128xf32>
    %36 = vector.broadcast %35 : vector<1x128xf32> to vector<8x128xf32>
    %37 = arith.addf %34, %36 : vector<8x128xf32>
    %c0_29 = arith.constant 0 : index
    %c0_30 = arith.constant 0 : index
    %38 = vector.load %arg12[%c0_29, %c0_30] : memref<8x128xf32, #tpu.memory_space<vmem>>, vector<8x128xf32>
    tpu.vector_store %arg12[%c0_29, %c0_30], %37 {strides = array<i32>} : memref<8x128xf32, #tpu.memory_space<vmem>>, vector<8x128xf32>,
    return
  }
  func.func @transform_0(%arg0: i32) -> (i32, i32) {
    %c0_i32 = arith.constant 0 : i32
    %c0_i32_0 = arith.constant 0 : i32
    return %arg0, %c0_i32 : i32, i32
  }
  func.func @transform_1(%arg0: i32) -> (i32, i32) {
    %c0_i32 = arith.constant 0 : i32
    %c0_i32_0 = arith.constant 0 : i32
    %c0_i32_1 = arith.constant 0 : i32
    return %c0_i32, %c0_i32_0 : i32, i32
  }
  func.func @transform_2(%arg0: i32) -> (i32, i32) {
    %c0_i32 = arith.constant 0 : i32
    %c0_i32_0 = arith.constant 0 : i32
    %c0_i32_1 = arith.constant 0 : i32
    return %c0_i32, %c0_i32_0 : i32, i32
  }
  func.func @transform_3(%arg0: i32) -> (i32, i32) {
    %c0_i32 = arith.constant 0 : i32
    %c0_i32_0 = arith.constant 0 : i32
    %c0_i32_1 = arith.constant 0 : i32
    return %c0_i32, %c0_i32_0 : i32, i32
  }
  func.func @transform_4(%arg0: i32) -> (i32, i32) {
    %c0_i32 = arith.constant 0 : i32
    %c0_i32_0 = arith.constant 0 : i32
    %c0_i32_1 = arith.constant 0 : i32
    return %c0_i32, %c0_i32_0 : i32, i32
  }
  func.func @transform_5(%arg0: i32) -> (i32, i32) {
    %c0_i32 = arith.constant 0 : i32
    %c0_i32_0 = arith.constant 0 : i32
    %c0_i32_1 = arith.constant 0 : i32
    return %c0_i32, %c0_i32_0 : i32, i32
  }
  func.func @transform_6(%arg0: i32) -> (i32, i32) {
    %c0_i32 = arith.constant 0 : i32
    %c0_i32_0 = arith.constant 0 : i32
    %c0_i32_1 = arith.constant 0 : i32
    return %c0_i32, %c0_i32_0 : i32, i32
  }
  func.func @transform_7(%arg0: i32) -> (i32, i32) {
    %c0_i32 = arith.constant 0 : i32
    %c0_i32_0 = arith.constant 0 : i32
    %c0_i32_1 = arith.constant 0 : i32
    return %c0_i32, %c0_i32_0 : i32, i32
  }
  func.func @transform_8(%arg0: i32) -> (i32, i32) {
    %c0_i32 = arith.constant 0 : i32
    %c0_i32_0 = arith.constant 0 : i32
    %c0_i32_1 = arith.constant 0 : i32
    return %c0_i32, %c0_i32_0 : i32, i32
  }
  func.func @transform_9(%arg0: i32) -> (i32, i32) {
    %c0_i32 = arith.constant 0 : i32
    %c0_i32_0 = arith.constant 0 : i32
    %c0_i32_1 = arith.constant 0 : i32
    return %c0_i32, %c0_i32_0 : i32, i32
  }
  func.func @transform_10(%arg0: i32) -> (i32, i32) {
    %c0_i32 = arith.constant 0 : i32
    %c0_i32_0 = arith.constant 0 : i32
    %c0_i32_1 = arith.constant 0 : i32
    return %c0_i32, %c0_i32_0 : i32, i32
  }
  func.func @transform_11(%arg0: i32) -> (i32, i32) {
    %c0_i32 = arith.constant 0 : i32
    %c0_i32_0 = arith.constant 0 : i32
    return %arg0, %c0_i32 : i32, i32
  }
}

</mosaic_0001>

<llo_original>
// kernel: tpu_custom_call.1
$region0: #{tpu_custom_call.1}
  #allocation0 [shape = 'u32[]', space=smem, size = 0x4, offset = 0x4, fixed_abs, tag = 'smem constant byte address 0x4 - core index']
  #allocation1 [shape = 'u32[144,128]{1,0:T(1,128)}', space=vmem, size = 0x12000, scoped, tag = 'internal scratch']
  %s0 = inlined_call_operand.hbm [shape: bf16[8,128], index: 0, kind: input, shape index: {}]
  %s1 = inlined_call_operand.hbm [shape: bf16[128,128], index: 1, kind: input, shape index: {}]
  %s2 = inlined_call_operand.vmem [shape: f32[1,128], index: 2, kind: input, shape index: {}]
  %s3 = inlined_call_operand.hbm [shape: bf16[128,128], index: 3, kind: input, shape index: {}]
  %s4 = inlined_call_operand.vmem [shape: f32[1,128], index: 4, kind: input, shape index: {}]
  %s5 = inlined_call_operand.hbm [shape: bf16[128,128], index: 5, kind: input, shape index: {}]
  %s6 = inlined_call_operand.vmem [shape: f32[1,128], index: 6, kind: input, shape index: {}]
  %s7 = inlined_call_operand.hbm [shape: bf16[128,128], index: 7, kind: input, shape index: {}]
  %s8 = inlined_call_operand.vmem [shape: f32[1,128], index: 8, kind: input, shape index: {}]
  %s9 = inlined_call_operand.hbm [shape: bf16[128,128], index: 9, kind: input, shape index: {}]
  %s10 = inlined_call_operand.vmem [shape: f32[1,128], index: 10, kind: input, shape index: {}]
  %s11 = inlined_call_operand.hbm [shape: f32[8,128], index: 11, kind: output, shape index: {}]
  %s12 = sld [smem:[#allocation0]]
  $region78: #{tpu_custom_call.1} parent=0
    _
  %s14 = ssub.s32 1, %s12
  %s15 = scalar_select 0, %s14, %s12
  $region1: #{tpu_custom_call.1} parent=0
    #allocation2 [shape = 'u8[2048]{0}', space=vmem, size = 0x800, scoped, tag = 'input window, operand 0, single buffered']
    #allocation3 [shape = 's32[1]{0}', space=sflag, size = 0x4, scoped, tag = 'scoped memory for tpu_custom_call.1']
    #allocation4 [shape = 's32[1]{0}', space=sflag, size = 0x4, scoped, tag = 'scoped memory for tpu_custom_call.1']
    #allocation5 [shape = 'u8[32768]{0}', space=vmem, size = 0x8000, scoped, tag = 'input window, operand 1, single buffered']
    #allocation6 [shape = 's32[1]{0}', space=sflag, size = 0x4, scoped, tag = 'scoped memory for tpu_custom_call.1']
    #allocation7 [shape = 'u8[32768]{0}', space=vmem, size = 0x8000, scoped, tag = 'input window, operand 3, single buffered']
    #allocation8 [shape = 'u8[32768]{0}', space=vmem, size = 0x8000, scoped, tag = 'input window, operand 5, single buffered']
    #allocation9 [shape = 's32[1]{0}', space=sflag, size = 0x4, scoped, tag = 'scoped memory for tpu_custom_call.1']
    #allocation10 [shape = 'u8[32768]{0}', space=vmem, size = 0x8000, scoped, tag = 'input window, operand 7, single buffered']
    #allocation11 [shape = 'u8[32768]{0}', space=vmem, size = 0x8000, scoped, tag = 'input window, operand 9, single buffered']
    #allocation12 [shape = 's32[1]{0}', space=sflag, size = 0x4, scoped, tag = 'scoped memory for tpu_custom_call.1']
    #allocation13 [shape = 'u8[4096]{0}', space=vmem, size = 0x1000, scoped, tag = 'output window, operand 0, single buffered']
    %16 = vsyncpa [#allocation3], 0
    %17 = vsyncpa [#allocation6], 0
    %18 = vsyncpa [#allocation9], 0
    %19 = vsyncpa [#allocation12], 0
    %20 = vsyncpa [#allocation4], 0
    // Predicated region
    $region2: #{tpu_custom_call.1} parent=1 // pred_check
      _
    $region3: #{tpu_custom_call.1} parent=1 // pred_check_branch
      %22 = sbr.rel (0) target = $region5
    $region4: #{tpu_custom_call.1} parent=1 // pred_region
      %s24 = ssub.s32 64, 64
      %25 = vsyncadd [#allocation3], %s24
      %s27 = sshll.u32 [#allocation2], 4
      %s28 = int_to_ptr.vmem [resolvable:$true] %s27
      %30 = dma.hbm_to_vmem [thread:$0]  %s0, 64, %s28, [#allocation3]
    $region5: #{tpu_custom_call.1} parent=1 // pred_fallthru
      _
    // Predicated region
    $region6: #{tpu_custom_call.1} parent=1 // pred_check
      _
    $region7: #{tpu_custom_call.1} parent=1 // pred_check_branch
      %32 = sbr.rel (0) target = $region9
    $region8: #{tpu_custom_call.1} parent=1 // pred_region
      %s34 = ssub.s32 1024, 1024
      %35 = vsyncadd [#allocation6], %s34
      %s36 = sshll.u32 [#allocation5], 4
      %s37 = int_to_ptr.vmem [resolvable:$true] %s36
      %42 = dma.hbm_to_vmem [thread:$0]  %s1, 1024, %s37, [#allocation6], 64, 64, 4
    $region9: #{tpu_custom_call.1} parent=1 // pred_fallthru
      _
    // Predicated region
    $region10: #{tpu_custom_call.1} parent=1 // pred_check
      _
    $region11: #{tpu_custom_call.1} parent=1 // pred_check_branch
      %44 = sbr.rel (0) target = $region13
    $region12: #{tpu_custom_call.1} parent=1 // pred_region
      _
    $region13: #{tpu_custom_call.1} parent=1 // pred_fallthru
      _
    // Predicated region
    $region14: #{tpu_custom_call.1} parent=1 // pred_check
      _
    $region15: #{tpu_custom_call.1} parent=1 // pred_check_branch
      %46 = sbr.rel (0) target = $region17
    $region16: #{tpu_custom_call.1} parent=1 // pred_region
      %s48 = ssub.s32 1024, 1024
      %49 = vsyncadd [#allocation6], %s48
      %s50 = sshll.u32 [#allocation7], 4
      %s51 = int_to_ptr.vmem [resolvable:$true] %s50
      %56 = dma.hbm_to_vmem [thread:$0]  %s3, 1024, %s51, [#allocation6], 64, 64, 4
    $region17: #{tpu_custom_call.1} parent=1 // pred_fallthru
      _
    // Predicated region
    $region18: #{tpu_custom_call.1} parent=1 // pred_check
      _
    $region19: #{tpu_custom_call.1} parent=1 // pred_check_branch
      %58 = sbr.rel (0) target = $region21
    $region20: #{tpu_custom_call.1} parent=1 // pred_region
      _
    $region21: #{tpu_custom_call.1} parent=1 // pred_fallthru
      _
    // Predicated region
    $region22: #{tpu_custom_call.1} parent=1 // pred_check
      _
    $region23: #{tpu_custom_call.1} parent=1 // pred_check_branch
      %60 = sbr.rel (0) target = $region25
    $region24: #{tpu_custom_call.1} parent=1 // pred_region
      %s62 = ssub.s32 1024, 1024
      %63 = vsyncadd [#allocation9], %s62
      %s64 = sshll.u32 [#allocation8], 4
      %s65 = int_to_ptr.vmem [resolvable:$true] %s64
      %70 = dma.hbm_to_vmem [thread:$0]  %s5, 1024, %s65, [#allocation9], 64, 64, 4
    $region25: #{tpu_custom_call.1} parent=1 // pred_fallthru
      _
    // Predicated region
    $region26: #{tpu_custom_call.1} parent=1 // pred_check
      _
    $region27: #{tpu_custom_call.1} parent=1 // pred_check_branch
      %72 = sbr.rel (0) target = $region29
    $region28: #{tpu_custom_call.1} parent=1 // pred_region
      _
    $region29: #{tpu_custom_call.1} parent=1 // pred_fallthru
      _
    // Predicated region
    $region30: #{tpu_custom_call.1} parent=1 // pred_check
      _
    $region31: #{tpu_custom_call.1} parent=1 // pred_check_branch
      %74 = sbr.rel (0) target = $region33
    $region32: #{tpu_custom_call.1} parent=1 // pred_region
      %s76 = ssub.s32 1024, 1024
      %77 = vsyncadd [#allocation9], %s76
      %s78 = sshll.u32 [#allocation10], 4
      %s79 = int_to_ptr.vmem [resolvable:$true] %s78
      %84 = dma.hbm_to_vmem [thread:$0]  %s7, 1024, %s79, [#allocation9], 64, 64, 4
    $region33: #{tpu_custom_call.1} parent=1 // pred_fallthru
      _
    // Predicated region
    $region34: #{tpu_custom_call.1} parent=1 // pred_check
      _
    $region35: #{tpu_custom_call.1} parent=1 // pred_check_branch
      %86 = sbr.rel (0) target = $region37
    $region36: #{tpu_custom_call.1} parent=1 // pred_region
      _
    $region37: #{tpu_custom_call.1} parent=1 // pred_fallthru
      _
    // Predicated region
    $region38: #{tpu_custom_call.1} parent=1 // pred_check
      _
    $region39: #{tpu_custom_call.1} parent=1 // pred_check_branch
      %88 = sbr.rel (0) target = $region41
    $region40: #{tpu_custom_call.1} parent=1 // pred_region
      %s90 = ssub.s32 1024, 1024
      %91 = vsyncadd [#allocation12], %s90
      %s92 = sshll.u32 [#allocation11], 4
      %s93 = int_to_ptr.vmem [resolvable:$true] %s92
      %98 = dma.hbm_to_vmem [thread:$0]  %s9, 1024, %s93, [#allocation12], 64, 64, 4
    $region41: #{tpu_custom_call.1} parent=1 // pred_fallthru
      _
    // Predicated region
    $region42: #{tpu_custom_call.1} parent=1 // pred_check
      _
    $region43: #{tpu_custom_call.1} parent=1 // pred_check_branch
      %100 = sbr.rel (0) target = $region45
    $region44: #{tpu_custom_call.1} parent=1 // pred_region
      _
    $region45: #{tpu_custom_call.1} parent=1 // pred_fallthru
      _
    // Predicated region
    $region46: #{tpu_custom_call.1} parent=1 // pred_check
      _
    $region47: #{tpu_custom_call.1} parent=1 // pred_check_branch
      %102 = sbr.rel (0) target = $region49
    $region48: #{tpu_custom_call.1} parent=1 // pred_region
      %103 = dma.done [#allocation3], 64
    $region49: #{tpu_custom_call.1} parent=1 // pred_fallthru
      _
    // Predicated region
    $region50: #{tpu_custom_call.1} parent=1 // pred_check
      _
    $region51: #{tpu_custom_call.1} parent=1 // pred_check_branch
      %105 = sbr.rel (0) target = $region53
    $region52: #{tpu_custom_call.1} parent=1 // pred_region
      %106 = dma.done [#allocation6], 1024
    $region53: #{tpu_custom_call.1} parent=1 // pred_fallthru
      _
    // Predicated region
    $region54: #{tpu_custom_call.1} parent=1 // pred_check
      _
    $region55: #{tpu_custom_call.1} parent=1 // pred_check_branch
      %108 = sbr.rel (0) target = $region57
    $region56: #{tpu_custom_call.1} parent=1 // pred_region
      %109 = dma.done [#allocation6], 1024
    $region57: #{tpu_custom_call.1} parent=1 // pred_fallthru
      _
    // Predicated region
    $region58: #{tpu_custom_call.1} parent=1 // pred_check
      _
    $region59: #{tpu_custom_call.1} parent=1 // pred_check_branch
      %111 = sbr.rel (0) target = $region61
    $region60: #{tpu_custom_call.1} parent=1 // pred_region
      %112 = dma.done [#allocation9], 1024
    $region61: #{tpu_custom_call.1} parent=1 // pred_fallthru
      _
    // Predicated region
    $region62: #{tpu_custom_call.1} parent=1 // pred_check
      _
    $region63: #{tpu_custom_call.1} parent=1 // pred_check_branch
      %114 = sbr.rel (0) target = $region65
    $region64: #{tpu_custom_call.1} parent=1 // pred_region
      %115 = dma.done [#allocation9], 1024
    $region65: #{tpu_custom_call.1} parent=1 // pred_fallthru
      _
    // Predicated region
    $region66: #{tpu_custom_call.1} parent=1 // pred_check
      _
    $region67: #{tpu_custom_call.1} parent=1 // pred_check_branch
      %117 = sbr.rel (0) target = $region69
    $region68: #{tpu_custom_call.1} parent=1 // pred_region
      %118 = dma.done [#allocation12], 1024
    $region69: #{tpu_custom_call.1} parent=1 // pred_fallthru
      _
    %v120 = vld [vmem:[#allocation2] sm:$0xf]
    %v121 = vld [vmem:[#allocation5] sm:$0xf]
    %v122 = vld [vmem:[#allocation5 + $0x4] sm:$0xf]
    %v123 = vld [vmem:[#allocation5 + $0x8] sm:$0xf]
    %v124 = vld [vmem:[#allocation5 + $0xc] sm:$0xf]
    %v125 = vld [vmem:[#allocation5 + $0x10] sm:$0xf]
    %v126 = vld [vmem:[#allocation5 + $0x14] sm:$0xf]
    %v127 = vld [vmem:[#allocation5 + $0x18] sm:$0xf]
    %v128 = vld [vmem:[#allocation5 + $0x1c] sm:$0xf]
    %v129 = vld [vmem:[#allocation5 + $0x20] sm:$0xf]
    %v130 = vld [vmem:[#allocation5 + $0x24] sm:$0xf]
    %v131 = vld [vmem:[#allocation5 + $0x28] sm:$0xf]
    %v132 = vld [vmem:[#allocation5 + $0x2c] sm:$0xf]
    %v133 = vld [vmem:[#allocation5 + $0x30] sm:$0xf]
    %v134 = vld [vmem:[#allocation5 + $0x34] sm:$0xf]
    %v135 = vld [vmem:[#allocation5 + $0x38] sm:$0xf]
    %v136 = vld [vmem:[#allocation5 + $0x3c] sm:$0xf]
    %v137 = vld [vmem:[%s2] sm:$0x1]
    %v139 = vlaneseq
    %v140 = vshrl.u32 %v139, 7
    %v141 = vsub.s32 0, %v140
    %v142 = vrot.slane %v137, %v141
    %v160 = vunpack.c.l.b16 %v121
    %v161 = vunpack.c.l.b16 %v122
    %v162 = vunpack.c.l.b16 %v123
    %v163 = vunpack.c.l.b16 %v124
    %v164 = vunpack.c.l.b16 %v125
    %v165 = vunpack.c.l.b16 %v126
    %v166 = vunpack.c.l.b16 %v127
    %v167 = vunpack.c.l.b16 %v128
    %v168 = vunpack.c.l.b16 %v129
    %v169 = vunpack.c.l.b16 %v130
    %v170 = vunpack.c.l.b16 %v131
    %v171 = vunpack.c.l.b16 %v132
    %v172 = vunpack.c.l.b16 %v133
    %v173 = vunpack.c.l.b16 %v134
    %v174 = vunpack.c.l.b16 %v135
    %v175 = vunpack.c.l.b16 %v136
    %v176 = vpack.c.b16 %v161, %v160
    %v177 = vpack.c.b16 %v163, %v162
    %v178 = vpack.c.b16 %v165, %v164
    %v179 = vpack.c.b16 %v167, %v166
    %v180 = vpack.c.b16 %v169, %v168
    %v181 = vpack.c.b16 %v171, %v170
    %v182 = vpack.c.b16 %v173, %v172
    %v183 = vpack.c.b16 %v175, %v174
    %192 = vmatprep.subr.bf16.mxu0 0
    %193 = vmatpush1.bf16.msra.mxu0 %v183
    %194 = vmatprep.subr.bf16.mxu0 0
    %195 = vmatpush1.bf16.msra.mxu0 %v182
    %196 = vmatprep.subr.bf16.mxu0 0
    %197 = vmatpush1.bf16.msra.mxu0 %v181
    %198 = vmatprep.subr.bf16.mxu0 0
    %199 = vmatpush1.bf16.msra.mxu0 %v180
    %200 = vmatprep.subr.bf16.mxu0 0
    %201 = vmatpush1.bf16.msra.mxu0 %v179
    %202 = vmatprep.subr.bf16.mxu0 0
    %203 = vmatpush1.bf16.msra.mxu0 %v178
    %204 = vmatprep.subr.bf16.mxu0 0
    %205 = vmatpush1.bf16.msra.mxu0 %v177
    %206 = vmatprep.subr.bf16.mxu0 0
    %207 = vmatpush1.bf16.msra.mxu0 %v176
    %208 = vmatprep.subr.bf16.mxu0 0
    %209 = vmatpush2.bf16.msra.mxu0 0
    %210 = vmatprep.subr.bf16.mxu0 0
    %211 = vmatpush2.bf16.msra.mxu0 0
    %212 = vmatprep.subr.bf16.mxu0 0
    %213 = vmatpush2.bf16.msra.mxu0 0
    %214 = vmatprep.subr.bf16.mxu0 0
    %215 = vmatpush2.bf16.msra.mxu0 0
    %216 = vmatprep.subr.bf16.mxu0 0
    %217 = vmatpush2.bf16.msra.mxu0 0
    %218 = vmatprep.subr.bf16.mxu0 0
    %219 = vmatpush2.bf16.msra.mxu0 0
    %220 = vmatprep.subr.bf16.mxu0 0
    %221 = vmatpush2.bf16.msra.mxu0 0
    %222 = vmatprep.subr.bf16.mxu0 0
    %223 = vmatpush2.bf16.msra.mxu0 0
    %224 = vmatprep.mubr.bf16.mxu0 0
    %225 = vmatmul.mubr.bf16.gmra.mxu0 %v120
    %v226 = vpop.f32.mrf.mxu0
    %v227 = vadd.f32 %v142, %v226
    %v228 = vpop.f32.mrf.mxu0
    %v229 = vpop.f32.mrf.mxu0
    %v230 = vpop.f32.mrf.mxu0
    %231 = vdwg.mxu0
    %v232 = vmax.f32 %v227, 0.0
    %v233 = vpack.c.bf16 %v232, %v232
    %v234 = vld [vmem:[#allocation7] sm:$0xf]
    %v235 = vld [vmem:[#allocation7 + $0x4] sm:$0xf]
    %v236 = vld [vmem:[#allocation7 + $0x8] sm:$0xf]
    %v237 = vld [vmem:[#allocation7 + $0xc] sm:$0xf]
    %v238 = vld [vmem:[#allocation7 + $0x10] sm:$0xf]
    %v239 = vld [vmem:[#allocation7 + $0x14] sm:$0xf]
    %v240 = vld [vmem:[#allocation7 + $0x18] sm:$0xf]
    %v241 = vld [vmem:[#allocation7 + $0x1c] sm:$0xf]
    %v242 = vld [vmem:[#allocation7 + $0x20] sm:$0xf]
    %v243 = vld [vmem:[#allocation7 + $0x24] sm:$0xf]
    %v244 = vld [vmem:[#allocation7 + $0x28] sm:$0xf]
    %v245 = vld [vmem:[#allocation7 + $0x2c] sm:$0xf]
    %v246 = vld [vmem:[#allocation7 + $0x30] sm:$0xf]
    %v247 = vld [vmem:[#allocation7 + $0x34] sm:$0xf]
    %v248 = vld [vmem:[#allocation7 + $0x38] sm:$0xf]
    %v249 = vld [vmem:[#allocation7 + $0x3c] sm:$0xf]
    %v250 = vld [vmem:[%s4] sm:$0x1]
    %v252 = vlaneseq
    %v253 = vshrl.u32 %v252, 7
    %v254 = vsub.s32 0, %v253
    %v255 = vrot.slane %v250, %v254
    %v273 = vunpack.c.l.b16 %v234
    %v274 = vunpack.c.l.b16 %v235
    %v275 = vunpack.c.l.b16 %v236
    %v276 = vunpack.c.l.b16 %v237
    %v277 = vunpack.c.l.b16 %v238
    %v278 = vunpack.c.l.b16 %v239
    %v279 = vunpack.c.l.b16 %v240
    %v280 = vunpack.c.l.b16 %v241
    %v281 = vunpack.c.l.b16 %v242
    %v282 = vunpack.c.l.b16 %v243
    %v283 = vunpack.c.l.b16 %v244
    %v284 = vunpack.c.l.b16 %v245
    %v285 = vunpack.c.l.b16 %v246
    %v286 = vunpack.c.l.b16 %v247
    %v287 = vunpack.c.l.b16 %v248
    %v288 = vunpack.c.l.b16 %v249
    %v289 = vpack.c.b16 %v274, %v273
    %v290 = vpack.c.b16 %v276, %v275
    %v291 = vpack.c.b16 %v278, %v277
    %v292 = vpack.c.b16 %v280, %v279
    %v293 = vpack.c.b16 %v282, %v281
    %v294 = vpack.c.b16 %v284, %v283
    %v295 = vpack.c.b16 %v286, %v285
    %v296 = vpack.c.b16 %v288, %v287
    %305 = vmatprep.subr.bf16.mxu0 0
    %306 = vmatpush1.bf16.msra.mxu0 %v296
    %307 = vmatprep.subr.bf16.mxu0 0
    %308 = vmatpush1.bf16.msra.mxu0 %v295
    %309 = vmatprep.subr.bf16.mxu0 0
    %310 = vmatpush1.bf16.msra.mxu0 %v294
    %311 = vmatprep.subr.bf16.mxu0 0
    %312 = vmatpush1.bf16.msra.mxu0 %v293
    %313 = vmatprep.subr.bf16.mxu0 0
    %314 = vmatpush1.bf16.msra.mxu0 %v292
    %315 = vmatprep.subr.bf16.mxu0 0
    %316 = vmatpush1.bf16.msra.mxu0 %v291
    %317 = vmatprep.subr.bf16.mxu0 0
    %318 = vmatpush1.bf16.msra.mxu0 %v290
    %319 = vmatprep.subr.bf16.mxu0 0
    %320 = vmatpush1.bf16.msra.mxu0 %v289
    %321 = vmatprep.subr.bf16.mxu0 0
    %322 = vmatpush2.bf16.msra.mxu0 0
    %323 = vmatprep.subr.bf16.mxu0 0
    %324 = vmatpush2.bf16.msra.mxu0 0
    %325 = vmatprep.subr.bf16.mxu0 0
    %326 = vmatpush2.bf16.msra.mxu0 0
    %327 = vmatprep.subr.bf16.mxu0 0
    %328 = vmatpush2.bf16.msra.mxu0 0
    %329 = vmatprep.subr.bf16.mxu0 0
    %330 = vmatpush2.bf16.msra.mxu0 0
    %331 = vmatprep.subr.bf16.mxu0 0
    %332 = vmatpush2.bf16.msra.mxu0 0
    %333 = vmatprep.subr.bf16.mxu0 0
    %334 = vmatpush2.bf16.msra.mxu0 0
    %335 = vmatprep.subr.bf16.mxu0 0
    %336 = vmatpush2.bf16.msra.mxu0 0
    %337 = vmatprep.mubr.bf16.mxu0 0
    %338 = vmatmul.mubr.bf16.gmra.mxu0 %v233
    %v339 = vpop.f32.mrf.mxu0
    %v340 = vadd.f32 %v255, %v339
    %v341 = vpop.f32.mrf.mxu0
    %v342 = vpop.f32.mrf.mxu0
    %v343 = vpop.f32.mrf.mxu0
    %344 = vdwg.mxu0
    %v345 = vmax.f32 %v340, 0.0
    %v346 = vpack.c.bf16 %v345, %v345
    %v347 = vld [vmem:[#allocation8] sm:$0xf]
    %v348 = vld [vmem:[#allocation8 + $0x4] sm:$0xf]
    %v349 = vld [vmem:[#allocation8 + $0x8] sm:$0xf]
    %v350 = vld [vmem:[#allocation8 + $0xc] sm:$0xf]
    %v351 = vld [vmem:[#allocation8 + $0x10] sm:$0xf]
    %v352 = vld [vmem:[#allocation8 + $0x14] sm:$0xf]
    %v353 = vld [vmem:[#allocation8 + $0x18] sm:$0xf]
    %v354 = vld [vmem:[#allocation8 + $0x1c] sm:$0xf]
    %v355 = vld [vmem:[#allocation8 + $0x20] sm:$0xf]
    %v356 = vld [vmem:[#allocation8 + $0x24] sm:$0xf]
    %v357 = vld [vmem:[#allocation8 + $0x28] sm:$0xf]
    %v358 = vld [vmem:[#allocation8 + $0x2c] sm:$0xf]
    %v359 = vld [vmem:[#allocation8 + $0x30] sm:$0xf]
    %v360 = vld [vmem:[#allocation8 + $0x34] sm:$0xf]
    %v361 = vld [vmem:[#allocation8 + $0x38] sm:$0xf]
    %v362 = vld [vmem:[#allocation8 + $0x3c] sm:$0xf]
    %v363 = vld [vmem:[%s6] sm:$0x1]
    %v365 = vlaneseq
    %v366 = vshrl.u32 %v365, 7
    %v367 = vsub.s32 0, %v366
    %v368 = vrot.slane %v363, %v367
    %v386 = vunpack.c.l.b16 %v347
    %v387 = vunpack.c.l.b16 %v348
    %v388 = vunpack.c.l.b16 %v349
    %v389 = vunpack.c.l.b16 %v350
    %v390 = vunpack.c.l.b16 %v351
    %v391 = vunpack.c.l.b16 %v352
    %v392 = vunpack.c.l.b16 %v353
    %v393 = vunpack.c.l.b16 %v354
    %v394 = vunpack.c.l.b16 %v355
    %v395 = vunpack.c.l.b16 %v356
    %v396 = vunpack.c.l.b16 %v357
    %v397 = vunpack.c.l.b16 %v358
    %v398 = vunpack.c.l.b16 %v359
    %v399 = vunpack.c.l.b16 %v360
    %v400 = vunpack.c.l.b16 %v361
    %v401 = vunpack.c.l.b16 %v362
    %v402 = vpack.c.b16 %v387, %v386
    %v403 = vpack.c.b16 %v389, %v388
    %v404 = vpack.c.b16 %v391, %v390
    %v405 = vpack.c.b16 %v393, %v392
    %v406 = vpack.c.b16 %v395, %v394
    %v407 = vpack.c.b16 %v397, %v396
    %v408 = vpack.c.b16 %v399, %v398
    %v409 = vpack.c.b16 %v401, %v400
    %418 = vmatprep.subr.bf16.mxu0 0
    %419 = vmatpush1.bf16.msra.mxu0 %v409
    %420 = vmatprep.subr.bf16.mxu0 0
    %421 = vmatpush1.bf16.msra.mxu0 %v408
    %422 = vmatprep.subr.bf16.mxu0 0
    %423 = vmatpush1.bf16.msra.mxu0 %v407
    %424 = vmatprep.subr.bf16.mxu0 0
    %425 = vmatpush1.bf16.msra.mxu0 %v406
    %426 = vmatprep.subr.bf16.mxu0 0
    %427 = vmatpush1.bf16.msra.mxu0 %v405
    %428 = vmatprep.subr.bf16.mxu0 0
    %429 = vmatpush1.bf16.msra.mxu0 %v404
    %430 = vmatprep.subr.bf16.mxu0 0
    %431 = vmatpush1.bf16.msra.mxu0 %v403
    %432 = vmatprep.subr.bf16.mxu0 0
    %433 = vmatpush1.bf16.msra.mxu0 %v402
    %434 = vmatprep.subr.bf16.mxu0 0
    %435 = vmatpush2.bf16.msra.mxu0 0
    %436 = vmatprep.subr.bf16.mxu0 0
    %437 = vmatpush2.bf16.msra.mxu0 0
    %438 = vmatprep.subr.bf16.mxu0 0
    %439 = vmatpush2.bf16.msra.mxu0 0
    %440 = vmatprep.subr.bf16.mxu0 0
    %441 = vmatpush2.bf16.msra.mxu0 0
    %442 = vmatprep.subr.bf16.mxu0 0
    %443 = vmatpush2.bf16.msra.mxu0 0
    %444 = vmatprep.subr.bf16.mxu0 0
    %445 = vmatpush2.bf16.msra.mxu0 0
    %446 = vmatprep.subr.bf16.mxu0 0
    %447 = vmatpush2.bf16.msra.mxu0 0
    %448 = vmatprep.subr.bf16.mxu0 0
    %449 = vmatpush2.bf16.msra.mxu0 0
    %450 = vmatprep.mubr.bf16.mxu0 0
    %451 = vmatmul.mubr.bf16.gmra.mxu0 %v346
    %v452 = vpop.f32.mrf.mxu0
    %v453 = vadd.f32 %v368, %v452
    %v454 = vpop.f32.mrf.mxu0
    %v455 = vpop.f32.mrf.mxu0
    %v456 = vpop.f32.mrf.mxu0
    %457 = vdwg.mxu0
    %v458 = vmax.f32 %v453, 0.0
    %v459 = vpack.c.bf16 %v458, %v458
    %v460 = vld [vmem:[#allocation10] sm:$0xf]
    %v461 = vld [vmem:[#allocation10 + $0x4] sm:$0xf]
    %v462 = vld [vmem:[#allocation10 + $0x8] sm:$0xf]
    %v463 = vld [vmem:[#allocation10 + $0xc] sm:$0xf]
    %v464 = vld [vmem:[#allocation10 + $0x10] sm:$0xf]
    %v465 = vld [vmem:[#allocation10 + $0x14] sm:$0xf]
    %v466 = vld [vmem:[#allocation10 + $0x18] sm:$0xf]
    %v467 = vld [vmem:[#allocation10 + $0x1c] sm:$0xf]
    %v468 = vld [vmem:[#allocation10 + $0x20] sm:$0xf]
    %v469 = vld [vmem:[#allocation10 + $0x24] sm:$0xf]
    %v470 = vld [vmem:[#allocation10 + $0x28] sm:$0xf]
    %v471 = vld [vmem:[#allocation10 + $0x2c] sm:$0xf]
    %v472 = vld [vmem:[#allocation10 + $0x30] sm:$0xf]
    %v473 = vld [vmem:[#allocation10 + $0x34] sm:$0xf]
    %v474 = vld [vmem:[#allocation10 + $0x38] sm:$0xf]
    %v475 = vld [vmem:[#allocation10 + $0x3c] sm:$0xf]
    %v476 = vld [vmem:[%s8] sm:$0x1]
    %v478 = vlaneseq
    %v479 = vshrl.u32 %v478, 7
    %v480 = vsub.s32 0, %v479
    %v481 = vrot.slane %v476, %v480
    %v499 = vunpack.c.l.b16 %v460
    %v500 = vunpack.c.l.b16 %v461
    %v501 = vunpack.c.l.b16 %v462
    %v502 = vunpack.c.l.b16 %v463
    %v503 = vunpack.c.l.b16 %v464
    %v504 = vunpack.c.l.b16 %v465
    %v505 = vunpack.c.l.b16 %v466
    %v506 = vunpack.c.l.b16 %v467
    %v507 = vunpack.c.l.b16 %v468
    %v508 = vunpack.c.l.b16 %v469
    %v509 = vunpack.c.l.b16 %v470
    %v510 = vunpack.c.l.b16 %v471
    %v511 = vunpack.c.l.b16 %v472
    %v512 = vunpack.c.l.b16 %v473
    %v513 = vunpack.c.l.b16 %v474
    %v514 = vunpack.c.l.b16 %v475
    %v515 = vpack.c.b16 %v500, %v499
    %v516 = vpack.c.b16 %v502, %v501
    %v517 = vpack.c.b16 %v504, %v503
    %v518 = vpack.c.b16 %v506, %v505
    %v519 = vpack.c.b16 %v508, %v507
    %v520 = vpack.c.b16 %v510, %v509
    %v521 = vpack.c.b16 %v512, %v511
    %v522 = vpack.c.b16 %v514, %v513
    %531 = vmatprep.subr.bf16.mxu0 0
    %532 = vmatpush1.bf16.msra.mxu0 %v522
    %533 = vmatprep.subr.bf16.mxu0 0
    %534 = vmatpush1.bf16.msra.mxu0 %v521
    %535 = vmatprep.subr.bf16.mxu0 0
    %536 = vmatpush1.bf16.msra.mxu0 %v520
    %537 = vmatprep.subr.bf16.mxu0 0
    %538 = vmatpush1.bf16.msra.mxu0 %v519
    %539 = vmatprep.subr.bf16.mxu0 0
    %540 = vmatpush1.bf16.msra.mxu0 %v518
    %541 = vmatprep.subr.bf16.mxu0 0
    %542 = vmatpush1.bf16.msra.mxu0 %v517
    %543 = vmatprep.subr.bf16.mxu0 0
    %544 = vmatpush1.bf16.msra.mxu0 %v516
    %545 = vmatprep.subr.bf16.mxu0 0
    %546 = vmatpush1.bf16.msra.mxu0 %v515
    %547 = vmatprep.subr.bf16.mxu0 0
    %548 = vmatpush2.bf16.msra.mxu0 0
    %549 = vmatprep.subr.bf16.mxu0 0
    %550 = vmatpush2.bf16.msra.mxu0 0
    %551 = vmatprep.subr.bf16.mxu0 0
    %552 = vmatpush2.bf16.msra.mxu0 0
    %553 = vmatprep.subr.bf16.mxu0 0
    %554 = vmatpush2.bf16.msra.mxu0 0
    %555 = vmatprep.subr.bf16.mxu0 0
    %556 = vmatpush2.bf16.msra.mxu0 0
    %557 = vmatprep.subr.bf16.mxu0 0
    %558 = vmatpush2.bf16.msra.mxu0 0
    %559 = vmatprep.subr.bf16.mxu0 0
    %560 = vmatpush2.bf16.msra.mxu0 0
    %561 = vmatprep.subr.bf16.mxu0 0
    %562 = vmatpush2.bf16.msra.mxu0 0
    %563 = vmatprep.mubr.bf16.mxu0 0
    %564 = vmatmul.mubr.bf16.gmra.mxu0 %v459
    %v565 = vpop.f32.mrf.mxu0
    %v566 = vadd.f32 %v481, %v565
    %v567 = vpop.f32.mrf.mxu0
    %v568 = vpop.f32.mrf.mxu0
    %v569 = vpop.f32.mrf.mxu0
    %570 = vdwg.mxu0
    %v571 = vmax.f32 %v566, 0.0
    %v572 = vpack.c.bf16 %v571, %v571
    %v573 = vld [vmem:[#allocation11] sm:$0xf]
    %v574 = vld [vmem:[#allocation11 + $0x4] sm:$0xf]
    %v575 = vld [vmem:[#allocation11 + $0x8] sm:$0xf]
    %v576 = vld [vmem:[#allocation11 + $0xc] sm:$0xf]
    %v577 = vld [vmem:[#allocation11 + $0x10] sm:$0xf]
    %v578 = vld [vmem:[#allocation11 + $0x14] sm:$0xf]
    %v579 = vld [vmem:[#allocation11 + $0x18] sm:$0xf]
    %v580 = vld [vmem:[#allocation11 + $0x1c] sm:$0xf]
    %v581 = vld [vmem:[#allocation11 + $0x20] sm:$0xf]
    %v582 = vld [vmem:[#allocation11 + $0x24] sm:$0xf]
    %v583 = vld [vmem:[#allocation11 + $0x28] sm:$0xf]
    %v584 = vld [vmem:[#allocation11 + $0x2c] sm:$0xf]
    %v585 = vld [vmem:[#allocation11 + $0x30] sm:$0xf]
    %v586 = vld [vmem:[#allocation11 + $0x34] sm:$0xf]
    %v587 = vld [vmem:[#allocation11 + $0x38] sm:$0xf]
    %v588 = vld [vmem:[#allocation11 + $0x3c] sm:$0xf]
    %v589 = vld [vmem:[%s10] sm:$0x1]
    %v591 = vlaneseq
    %v592 = vshrl.u32 %v591, 7
    %v593 = vsub.s32 0, %v592
    %v594 = vrot.slane %v589, %v593
    %v612 = vunpack.c.l.b16 %v573
    %v613 = vunpack.c.l.b16 %v574
    %v614 = vunpack.c.l.b16 %v575
    %v615 = vunpack.c.l.b16 %v576
    %v616 = vunpack.c.l.b16 %v577
    %v617 = vunpack.c.l.b16 %v578
    %v618 = vunpack.c.l.b16 %v579
    %v619 = vunpack.c.l.b16 %v580
    %v620 = vunpack.c.l.b16 %v581
    %v621 = vunpack.c.l.b16 %v582
    %v622 = vunpack.c.l.b16 %v583
    %v623 = vunpack.c.l.b16 %v584
    %v624 = vunpack.c.l.b16 %v585
    %v625 = vunpack.c.l.b16 %v586
    %v626 = vunpack.c.l.b16 %v587
    %v627 = vunpack.c.l.b16 %v588
    %v628 = vpack.c.b16 %v613, %v612
    %v629 = vpack.c.b16 %v615, %v614
    %v630 = vpack.c.b16 %v617, %v616
    %v631 = vpack.c.b16 %v619, %v618
    %v632 = vpack.c.b16 %v621, %v620
    %v633 = vpack.c.b16 %v623, %v622
    %v634 = vpack.c.b16 %v625, %v624
    %v635 = vpack.c.b16 %v627, %v626
    %644 = vmatprep.subr.bf16.mxu0 0
    %645 = vmatpush1.bf16.msra.mxu0 %v635
    %646 = vmatprep.subr.bf16.mxu0 0
    %647 = vmatpush1.bf16.msra.mxu0 %v634
    %648 = vmatprep.subr.bf16.mxu0 0
    %649 = vmatpush1.bf16.msra.mxu0 %v633
    %650 = vmatprep.subr.bf16.mxu0 0
    %651 = vmatpush1.bf16.msra.mxu0 %v632
    %652 = vmatprep.subr.bf16.mxu0 0
    %653 = vmatpush1.bf16.msra.mxu0 %v631
    %654 = vmatprep.subr.bf16.mxu0 0
    %655 = vmatpush1.bf16.msra.mxu0 %v630
    %656 = vmatprep.subr.bf16.mxu0 0
    %657 = vmatpush1.bf16.msra.mxu0 %v629
    %658 = vmatprep.subr.bf16.mxu0 0
    %659 = vmatpush1.bf16.msra.mxu0 %v628
    %660 = vmatprep.subr.bf16.mxu0 0
    %661 = vmatpush2.bf16.msra.mxu0 0
    %662 = vmatprep.subr.bf16.mxu0 0
    %663 = vmatpush2.bf16.msra.mxu0 0
    %664 = vmatprep.subr.bf16.mxu0 0
    %665 = vmatpush2.bf16.msra.mxu0 0
    %666 = vmatprep.subr.bf16.mxu0 0
    %667 = vmatpush2.bf16.msra.mxu0 0
    %668 = vmatprep.subr.bf16.mxu0 0
    %669 = vmatpush2.bf16.msra.mxu0 0
    %670 = vmatprep.subr.bf16.mxu0 0
    %671 = vmatpush2.bf16.msra.mxu0 0
    %672 = vmatprep.subr.bf16.mxu0 0
    %673 = vmatpush2.bf16.msra.mxu0 0
    %674 = vmatprep.subr.bf16.mxu0 0
    %675 = vmatpush2.bf16.msra.mxu0 0
    %676 = vmatprep.mubr.bf16.mxu0 0
    %677 = vmatmul.mubr.bf16.gmra.mxu0 %v572
    %v678 = vpop.f32.mrf.mxu0
    %v679 = vadd.f32 %v594, %v678
    %v680 = vpop.f32.mrf.mxu0
    %v681 = vpop.f32.mrf.mxu0
    %v682 = vpop.f32.mrf.mxu0
    %683 = vdwg.mxu0
    %684 = vst [vmem:[#allocation13] sm:$0xff] %v679
    // Predicated region
    $region70: #{tpu_custom_call.1} parent=1 // pred_check
      _
    $region71: #{tpu_custom_call.1} parent=1 // pred_check_branch
      %686 = sbr.rel (0) target = $region73
    $region72: #{tpu_custom_call.1} parent=1 // pred_region
      %s688 = ssub.s32 128, 128
      %689 = vsyncadd [#allocation4], %s688
      %s691 = sshll.u32 [#allocation13], 4
      %s692 = int_to_ptr.vmem [resolvable:$true] %s691
      %694 = dma.vmem_to_hbm [thread:$0]  %s692, 128, %s11, [#allocation4]
    $region73: #{tpu_custom_call.1} parent=1 // pred_fallthru
      _
    // Predicated region
    $region74: #{tpu_custom_call.1} parent=1 // pred_check
      _
    $region75: #{tpu_custom_call.1} parent=1 // pred_check_branch
      %696 = sbr.rel (0) target = $region77
    $region76: #{tpu_custom_call.1} parent=1 // pred_region
      %697 = dma.done [#allocation4], 128
    $region77: #{tpu_custom_call.1} parent=1 // pred_fallthru
      _
    %698 = vsyncpa [#allocation3], 1
    %699 = vsyncpa [#allocation6], 1
    %700 = vsyncpa [#allocation9], 1
    %701 = vsyncpa [#allocation12], 1
    %702 = vsyncpa [#allocation4], 1

</llo_original>
